<compile_context>
chip_gen: v7x
topology: tpu7x:2x2x1
jax: 0.10.0
libtpu: 0.0.40
codegen_flags: <defaults>
</compile_context>

<pallas_src>
import jax
import jax.numpy as jnp
from jax import lax
from jax.experimental import pallas as pl
from jax.experimental.pallas import tpu as pltpu


def _round_up(x: int, m: int) -> int:
    return (x + m - 1) // m * m


def _linear_kernel(x_ref, w_ref, b_ref, o_ref):
    # x_ref: (tm, K)   w_ref: (tn, K) [torch layout]   b_ref: (1, tn) f32
    # o_ref: (tm, tn)
    acc = lax.dot_general(
        x_ref[...],
        w_ref[...],
        dimension_numbers=(((1,), (1,)), ((), ())),   # contract shared last dim
        preferred_element_type=jnp.float32,
    )
    o_ref[...] = (acc + b_ref[...].astype(jnp.float32)).astype(o_ref.dtype)


def upsampling_lp(x, weight, bias, factor, *, tm=512, tn=None,
                  compute_dtype=None, vmem_budget_bytes=40 * 2**20):
    """x: (B, L, D); weight: (D*factor, D) [torch layout]; bias: (D*factor,).

    tn=None  -> use the full N as one tile when it fits the VMEM budget
                (weight fully resident), otherwise auto-tile N in 128 multiples.
    compute_dtype -> e.g. jnp.bfloat16 for MXU-native compute with f32 accumulate.
    """
    B, L, D = x.shape
    K = D
    N = D * factor
    assert weight.shape == (N, K)
    assert bias.shape == (N,)

    M = B * L
    out_dtype = x.dtype
    cdt = jnp.dtype(compute_dtype) if compute_dtype is not None else jnp.dtype(x.dtype)
    itemsize = cdt.itemsize
    out_itemsize = jnp.dtype(out_dtype).itemsize
    sub = {4: 8, 2: 16, 1: 32}.get(itemsize, 8)   # dtype-aware sublane multiple

    # --- tile selection (K is always a single full block) ------------------
    def est(tm_, tn_):
        # x + weight double-buffered, output double-buffered, bias + f32 temp.
        return (itemsize * 2 * (tm_ * K + tn_ * K)
                + out_itemsize * 2 * tm_ * tn_
                + 4 * (2 * tn_ + tm_ * tn_))

    tm_ = _round_up(min(tm, _round_up(M, sub)), sub)

    if tn is None:
        tn_ = N if est(tm_, N) <= vmem_budget_bytes else 512
    else:
        tn_ = tn
    if tn_ != N:
        tn_ = min(_round_up(tn_, 128), _round_up(N, 128))
        while est(tm_, tn_) > vmem_budget_bytes and tn_ > 128:
            tn_ = max(128, _round_up(tn_ // 2, 128))
    while est(tm_, tn_) > vmem_budget_bytes and tm_ > sub:
        tm_ = max(sub, _round_up(tm_ // 2, sub))

    vmem_limit = int(min(64 * 2**20, max(32 * 2**20, 1.5 * est(tm_, tn_))))

    Nt = pl.cdiv(N, tn_)
    Mt = pl.cdiv(M, tm_)

    # --- operands (no pad / slice copies) -----------------------------------
    x2d = x.reshape(M, K)
    w = weight
    if cdt != x2d.dtype:
        x2d = x2d.astype(cdt)
    if cdt != w.dtype:
        w = w.astype(cdt)
    b2d = bias.reshape(1, N).astype(jnp.float32)

    cost = pl.CostEstimate(
        flops=2 * M * K * N,
        # weight streamed once; x re-streamed once per N tile; out written once.
        bytes_accessed=itemsize * (Nt * M * K + N * K) + 4 * N + out_itemsize * M * N,
        transcendentals=0,
    )

    out2d = pl.pallas_call(
        _linear_kernel,
        out_shape=jax.ShapeDtypeStruct((M, N), out_dtype),
        grid_spec=pltpu.PrefetchScalarGridSpec(
            num_scalar_prefetch=0,
            grid=(Nt, Mt),                                   # N outer, M inner
            in_specs=[
                pl.BlockSpec((tm_, K), lambda j, i: (i, 0)),  # x tile (inner sweep)
                pl.BlockSpec((tn_, K), lambda j, i: (j, 0)),  # weight tile: constant
                                                              # across M sweep -> no re-DMA
                pl.BlockSpec((1, tn_), lambda j, i: (0, j)),  # bias tile
            ],
            out_specs=pl.BlockSpec((tm_, tn_), lambda j, i: (i, j)),
        ),
        compiler_params=pltpu.CompilerParams(
            dimension_semantics=("parallel", "parallel"),
            vmem_limit_bytes=vmem_limit,
        ),
        cost_estimate=cost,
    )(x2d, w, b2d)

    # (B, L, D*factor) -> (B, L*factor, D): contiguous reshape, same as torch.
    return out2d.reshape(B, L * factor, D)


def _reference(x, weight, bias, factor):
    B, L, D = x.shape
    y = x.reshape(B * L, D) @ weight.T + bias
    return y.reshape(B, L * factor, D)


if __name__ == "__main__":
    key = jax.random.PRNGKey(0)
    kx, kw, kb, kx2, kw2, kb2 = jax.random.split(key, 6)

    # --- primary small demo matching the module's forward: (B, L, D) -------
    B, L, D, factor = 2, 8, 32, 2
    x = jax.random.normal(kx, (B, L, D), dtype=jnp.float32)
    weight = jax.random.normal(kw, (D * factor, D), dtype=jnp.float32) * 0.05
    bias = jax.random.normal(kb, (D * factor,), dtype=jnp.float32) * 0.05

    out = jax.block_until_ready(upsampling_lp(x, weight, bias, factor))
    ref = _reference(x, weight, bias, factor)
    assert out.shape == (B, L * factor, D)
    assert jnp.allclose(out, ref, atol=1e-5, rtol=1e-5)

    # --- ragged shape: multi-tile M / N with masked partial-block stores ----
    B2, L2, D2, factor2 = 2, 72, 160, 2
    x2 = jax.random.normal(kx2, (B2, L2, D2), dtype=jnp.float32)
    weight2 = jax.random.normal(kw2, (D2 * factor2, D2), dtype=jnp.float32) * 0.02
    bias2 = jax.random.normal(kb2, (D2 * factor2,), dtype=jnp.float32) * 0.02

    out2 = jax.block_until_ready(
        upsampling_lp(x2, weight2, bias2, factor2, tm=64, tn=128))
    ref2 = _reference(x2, weight2, bias2, factor2)
    assert out2.shape == (B2, L2 * factor2, D2)
    assert jnp.allclose(out2, ref2, atol=1e-4, rtol=1e-4)

    # --- bf16 compute path (MXU-native, f32 accumulate) ---------------------
    out3 = jax.block_until_ready(
        upsampling_lp(x2, weight2, bias2, factor2, compute_dtype=jnp.bfloat16))
    assert out3.shape == (B2, L2 * factor2, D2)
    assert jnp.allclose(out3, ref2, atol=5e-2, rtol=5e-2)

    print("KERNEL_OK")
</pallas_src>

<mosaic_0001>
module attributes {stable_mosaic.version = 11 : i64} {
  func.func @_linear_kernel(%arg0: i32, %arg1: i32, %arg2: memref<16x32xf32, #tpu.memory_space<vmem>>, %arg3: memref<64x32xf32, #tpu.memory_space<vmem>>, %arg4: memref<1x64xf32, #tpu.memory_space<vmem>>, %arg5: memref<16x64xf32, #tpu.memory_space<vmem>>) attributes {dimension_semantics = [#tpu.dimension_semantics<parallel>, #tpu.dimension_semantics<parallel>], iteration_bounds = array<i64: 1, 1>, scalar_prefetch = 0 : i64, scratch_operands = 0 : i64, tpu.core_type = #tpu.core_type<tc>, window_params = [{transform_indices = @transform_0, window_bounds = array<i64: 16, 32>}, {transform_indices = @transform_1, window_bounds = array<i64: 64, 32>}, {transform_indices = @transform_2, window_bounds = array<i64: 1, 64>}, {transform_indices = @transform_3, window_bounds = array<i64: 16, 64>}]} {
    %c0 = arith.constant 0 : index
    %c0_0 = arith.constant 0 : index
    %0 = vector.load %arg2[%c0, %c0_0] : memref<16x32xf32, #tpu.memory_space<vmem>>, vector<16x32xf32>
    %c0_1 = arith.constant 0 : index
    %c0_2 = arith.constant 0 : index
    %1 = vector.load %arg3[%c0_1, %c0_2] : memref<64x32xf32, #tpu.memory_space<vmem>>, vector<64x32xf32>
    %cst = arith.constant dense<0.000000e+00> : vector<16x64xf32>
    %2 = tpu.matmul %0, %1, %cst {dimension_numbers = #tpu.dot_dimension_numbers<[1], [1], [0], [0], [0, 0, 1, 0], [], []>} : vector<16x32xf32>, vector<64x32xf32>, vector<16x64xf32> -> vector<16x64xf32>
    %c0_3 = arith.constant 0 : index
    %c0_4 = arith.constant 0 : index
    %3 = vector.load %arg4[%c0_3, %c0_4] : memref<1x64xf32, #tpu.memory_space<vmem>>, vector<1x64xf32>
    %4 = vector.broadcast %3 : vector<1x64xf32> to vector<16x64xf32>
    %5 = arith.addf %2, %4 : vector<16x64xf32>
    %c0_5 = arith.constant 0 : index
    %c0_6 = arith.constant 0 : index
    %6 = vector.load %arg5[%c0_5, %c0_6] : memref<16x64xf32, #tpu.memory_space<vmem>>, vector<16x64xf32>
    tpu.vector_store %arg5[%c0_5, %c0_6], %5 {strides = array<i32>} : memref<16x64xf32, #tpu.memory_space<vmem>>, vector<16x64xf32>,
    return
  }
  func.func @transform_0(%arg0: i32, %arg1: i32) -> (i32, i32) {
    %c0_i32 = arith.constant 0 : i32
    %c0_i32_0 = arith.constant 0 : i32
    return %arg1, %c0_i32 : i32, i32
  }
  func.func @transform_1(%arg0: i32, %arg1: i32) -> (i32, i32) {
    %c0_i32 = arith.constant 0 : i32
    %c0_i32_0 = arith.constant 0 : i32
    return %arg0, %c0_i32 : i32, i32
  }
  func.func @transform_2(%arg0: i32, %arg1: i32) -> (i32, i32) {
    %c0_i32 = arith.constant 0 : i32
    %c0_i32_0 = arith.constant 0 : i32
    return %c0_i32, %arg0 : i32, i32
  }
  func.func @transform_3(%arg0: i32, %arg1: i32) -> (i32, i32) {
    %c0_i32 = arith.constant 0 : i32
    return %arg1, %arg0 : i32, i32
  }
}

</mosaic_0001>

<llo_original>
// kernel: tpu_custom_call.1
$region0: #{tpu_custom_call.1}
  #allocation0 [shape = 'u32[]', space=smem, size = 0x4, offset = 0x4, fixed_abs, tag = 'smem constant byte address 0x4 - core index']
  #allocation1 [shape = 'u32[144,128]{1,0:T(1,128)}', space=vmem, size = 0x12000, scoped, tag = 'internal scratch']
  %s0 = inlined_call_operand.vmem [shape: f32[16,32], index: 0, kind: input, shape index: {}]
  %s1 = inlined_call_operand.vmem [shape: f32[64,32], index: 1, kind: input, shape index: {}]
  %s2 = inlined_call_operand.vmem [shape: f32[1,64], index: 2, kind: input, shape index: {}]
  %s3 = inlined_call_operand.hbm [shape: f32[16,64], index: 3, kind: output, shape index: {}]
  %s4 = sld [smem:[#allocation0]]
  $region22: #{tpu_custom_call.1} parent=0
    _
  %s6 = ssub.s32 1, %s4
  %s7 = scalar_select 0, %s6, %s4
  $region1: #{tpu_custom_call.1} parent=0
    #allocation2 [shape = 'u8[8192]{0}', space=vmem, size = 0x2000, scoped, tag = 'output window, operand 0, single buffered']
    #allocation3 [shape = 's32[1]{0}', space=sflag, size = 0x4, scoped, tag = 'scoped memory for tpu_custom_call.1']
    %8 = vsyncpa [#allocation3], 0
    // Predicated region
    $region2: #{tpu_custom_call.1} parent=1 // pred_check
      _
    $region3: #{tpu_custom_call.1} parent=1 // pred_check_branch
      %10 = sbr.rel (0) target = $region5
    $region4: #{tpu_custom_call.1} parent=1 // pred_region
      _
    $region5: #{tpu_custom_call.1} parent=1 // pred_fallthru
      _
    // Predicated region
    $region6: #{tpu_custom_call.1} parent=1 // pred_check
      _
    $region7: #{tpu_custom_call.1} parent=1 // pred_check_branch
      %12 = sbr.rel (0) target = $region9
    $region8: #{tpu_custom_call.1} parent=1 // pred_region
      _
    $region9: #{tpu_custom_call.1} parent=1 // pred_fallthru
      _
    // Predicated region
    $region10: #{tpu_custom_call.1} parent=1 // pred_check
      _
    $region11: #{tpu_custom_call.1} parent=1 // pred_check_branch
      %14 = sbr.rel (0) target = $region13
    $region12: #{tpu_custom_call.1} parent=1 // pred_region
      _
    $region13: #{tpu_custom_call.1} parent=1 // pred_fallthru
      _
    %v15 = vld [vmem:[%s0] sm:$0xff]
    %v16 = vld [vmem:[%s0 + $0x8] sm:$0xff]
    %v17 = vld [vmem:[%s1] sm:$0xff]
    %v18 = vld [vmem:[%s1 + $0x8] sm:$0xff]
    %v19 = vld [vmem:[%s1 + $0x10] sm:$0xff]
    %v20 = vld [vmem:[%s1 + $0x18] sm:$0xff]
    %v21 = vld [vmem:[%s1 + $0x20] sm:$0xff]
    %v22 = vld [vmem:[%s1 + $0x28] sm:$0xff]
    %v23 = vld [vmem:[%s1 + $0x30] sm:$0xff]
    %v24 = vld [vmem:[%s1 + $0x38] sm:$0xff]
    %v25 = vld [vmem:[%s2] sm:$0x1]
    %v27 = vlaneseq
    %v28 = vshrl.u32 %v27, 7
    %v29 = vsub.s32 0, %v28
    %v30 = vrot.slane %v25, %v29
    %vm32 = vcmask 261120
    %v34 = vsel %vm32, %v15, 0
    %v37 = vsel %vm32, %v16, 0
    %v40 = vsel %vm32, %v17, 0
    %v43 = vsel %vm32, %v18, 0
    %v46 = vsel %vm32, %v19, 0
    %v49 = vsel %vm32, %v20, 0
    %v52 = vsel %vm32, %v21, 0
    %v55 = vsel %vm32, %v22, 0
    %v58 = vsel %vm32, %v23, 0
    %v61 = vsel %vm32, %v24, 0
    %63 = vmatprep.subr.mxu0 0.0
    %64 = vmatpush1.xpose.msra.mxu0 %v40
    %65 = vmatprep.subr.mxu0 0.0
    %66 = vmatpush1.xpose.msra.mxu0 %v43
    %67 = vmatprep.subr.mxu0 0.0
    %68 = vmatpush1.xpose.msra.mxu0 %v46
    %69 = vmatprep.subr.mxu0 0.0
    %70 = vmatpush1.xpose.msra.mxu0 %v49
    %71 = vmatprep.subr.mxu0 0.0
    %72 = vmatpush1.xpose.msra.mxu0 %v52
    %73 = vmatprep.subr.mxu0 0.0
    %74 = vmatpush1.xpose.msra.mxu0 %v55
    %75 = vmatprep.subr.mxu0 0.0
    %76 = vmatpush1.xpose.msra.mxu0 %v58
    %77 = vmatprep.subr.mxu0 0.0
    %78 = vmatpush1.xpose.msra.mxu0 %v61
    %79 = vmatprep.subr.mxu0 0.0
    %80 = vmatpush1.xpose.msra.mxu0 0.0
    %81 = vmatprep.subr.mxu0 0.0
    %82 = vmatpush1.xpose.msra.mxu0 0.0
    %83 = vmatprep.subr.mxu0 0.0
    %84 = vmatpush1.xpose.msra.mxu0 0.0
    %85 = vmatprep.subr.mxu0 0.0
    %86 = vmatpush1.xpose.msra.mxu0 0.0
    %87 = vmatprep.subr.mxu0 0.0
    %88 = vmatpush1.xpose.msra.mxu0 0.0
    %89 = vmatprep.subr.mxu0 0.0
    %90 = vmatpush1.xpose.msra.mxu0 0.0
    %91 = vmatprep.subr.mxu0 0.0
    %92 = vmatpush1.xpose.msra.mxu0 0.0
    %93 = vmatprep.subr.mxu0 0.0
    %94 = vmatpush1.xpose.msra.mxu0 0.0
    %95 = vmatprep.subr.mxu0 0.0
    %96 = vmatpush1.xpose.msra.mxu0 0.0
    %97 = vmatprep.subr.mxu0 0.0
    %98 = vmatpush1.xpose.msra.mxu0 0.0
    %99 = vmatprep.subr.mxu0 0.0
    %100 = vmatpush1.xpose.msra.mxu0 0.0
    %101 = vmatprep.subr.mxu0 0.0
    %102 = vmatpush1.xpose.msra.mxu0 0.0
    %103 = vmatprep.subr.mxu0 0.0
    %104 = vmatpush1.xpose.msra.mxu0 0.0
    %105 = vmatprep.subr.mxu0 0.0
    %106 = vmatpush1.xpose.msra.mxu0 0.0
    %107 = vmatprep.subr.mxu0 0.0
    %108 = vmatpush1.xpose.msra.mxu0 0.0
    %109 = vmatprep.subr.mxu0 0.0
    %110 = vmatpush1.xpose.msra.mxu0 0.0
    %111 = vmatprep.subr.mxu0 0.0
    %112 = vmatpush1.xpose.msra.mxu0 0.0
    %113 = vmatprep.subr.mxu0 0.0
    %114 = vmatpush1.xpose.msra.mxu0 0.0
    %115 = vmatprep.subr.mxu0 0.0
    %116 = vmatpush1.xpose.msra.mxu0 0.0
    %117 = vmatprep.subr.mxu0 0.0
    %118 = vmatpush1.xpose.msra.mxu0 0.0
    %119 = vmatprep.subr.mxu0 0.0
    %120 = vmatpush1.xpose.msra.mxu0 0.0
    %121 = vmatprep.subr.mxu0 0.0
    %122 = vmatpush1.xpose.msra.mxu0 0.0
    %123 = vmatprep.subr.mxu0 0.0
    %124 = vmatpush1.xpose.msra.mxu0 0.0
    %125 = vmatprep.subr.mxu0 0.0
    %126 = vmatpush1.xpose.msra.mxu0 0.0
    %127 = vmatprep.mubr.f32.mxu0 0.0
    %128 = vmatmul.mubr.f32.gmra.mrb[0].mxu0 %v34
    %v129 = vpop.f32.mrb[0].mxu0
    %v130 = vadd.f32 %v30, %v129
    %v131 = vpop.f32.mrb[0].mxu0
    %132 = vmatprep.mubr.f32.mxu0 0.0
    %133 = vmatmul.mubr.f32.gmra.mrb[0].mxu0 %v37
    %v134 = vpop.f32.mrb[0].mxu0
    %v135 = vadd.f32 %v30, %v134
    %v136 = vpop.f32.mrb[0].mxu0
    %137 = vdwg.mxu0
    %vm138 = vcmask 523264
    %139 = vst.msk [vmem:[#allocation2] sm:$0xff] %vm138, %v130
    %140 = vst.msk [vmem:[#allocation2 + $0x8] sm:$0xff] %vm138, %v135
    // Predicated region
    $region14: #{tpu_custom_call.1} parent=1 // pred_check
      _
    $region15: #{tpu_custom_call.1} parent=1 // pred_check_branch
      %142 = sbr.rel (0) target = $region17
    $region16: #{tpu_custom_call.1} parent=1 // pred_region
      %s144 = ssub.s32 256, 256
      %145 = vsyncadd [#allocation3], %s144
      %s146 = sshll.u32 [#allocation2], 4
      %s147 = int_to_ptr.vmem [resolvable:$true] %s146
      %152 = dma.vmem_to_hbm [thread:$0]  %s147, 256, %s3, [#allocation3], 128, 128, 8
    $region17: #{tpu_custom_call.1} parent=1 // pred_fallthru
      _
    // Predicated region
    $region18: #{tpu_custom_call.1} parent=1 // pred_check
      _
    $region19: #{tpu_custom_call.1} parent=1 // pred_check_branch
      %154 = sbr.rel (0) target = $region21
    $region20: #{tpu_custom_call.1} parent=1 // pred_region
      %155 = dma.done [#allocation3], 256
    $region21: #{tpu_custom_call.1} parent=1 // pred_fallthru
      _
    %156 = vsyncpa [#allocation3], 1

</llo_original>
